<compile_context>
chip_gen: v5e
topology: v5e:2x2
jax: 0.10.0
libtpu: 0.0.40
codegen_flags: <defaults>
</compile_context>

<pallas_src>
import jax
import jax.numpy as jnp
from jax.experimental import pallas as pl
from jax.experimental.pallas import tpu as pltpu

# ---- static configuration (small synthetic shapes) -------------------------
B, C_IN, H, W = 2, 4, 16, 16        # input  (NCHW, like PyTorch)
KH = KW = 3                         # conv kernel of the synthetic "features"
C_FEAT = 32                         # num_ftrs == model.classifier.in_features
NUM_TASKS = 14                      # len(task_sequence)  (CheXpert tasks)
MODEL_UNCERTAINTY = False
NUM_OUT = 3 * NUM_TASKS if MODEL_UNCERTAINTY else NUM_TASKS
OUT_PAD = 128                       # lane-dense padded classifier width
HW = H * W                          # 256 output pixels per image
K_PATCH = KH * KW * C_IN            # raw im2col patch length = 36
K_PAD = 128                         # zero-padded contraction dim (lane-dense)


# ---- fused Pallas kernel ----------------------------------------------------
# grid = (B,): one grid step per image ("parallel" -> v7x megacore split).
# Per step: (256,128)bf16 @ (128,32)bf16 conv matmul -> bias+ReLU (f32) ->
# MXU pool (1,256)@(256,32) -> classifier (1,32)@(32,128) -> lane-dense store.
def fused_forward_kernel(patch_ref, wconv_ref, bconv_ref, wcls_ref, bcls_ref,
                         out_ref):
    patch = patch_ref[0]                                   # (HW, K_PAD) bf16

    # "features" conv as one bf16 matmul with f32 accumulation.
    feat = jnp.dot(patch, wconv_ref[...],
                   preferred_element_type=jnp.float32)     # (HW, C_FEAT) f32
    feat = jnp.maximum(feat + bconv_ref[...], 0.0)         # bias + ReLU (f32)

    # Global average pool as an MXU reduction (the 1/(H*W) scale is folded
    # into the classifier weights), chained into the classifier matmul.
    ones_row = jnp.ones((1, HW), jnp.float32)
    pooled = jnp.dot(ones_row, feat,
                     preferred_element_type=jnp.float32)   # (1, C_FEAT) f32
    logits = jnp.dot(pooled, wcls_ref[...],
                     preferred_element_type=jnp.float32) + bcls_ref[...]
    out_ref[0] = logits.astype(out_ref.dtype)              # (1, OUT_PAD)


@jax.jit
def model_forward(x, wconv_kpad_bf16, bconv_1c, wcls_pad, bcls_pad):
    """x: (B, C_in, H, W) NCHW float32.  Returns logits (B, NUM_OUT) f32."""
    # Wrapper-side im2col (padding=1 'SAME'): at this size the 9x inflation is
    # ~0.1 MB, negligible, and it keeps all relayout work out of the kernel.
    xpad = jnp.pad(x, ((0, 0), (0, 0), (1, 1), (1, 1)))          # (B,C,H+2,W+2)
    taps = [xpad[:, :, kh:kh + H, kw:kw + W]
            for kh in range(KH) for kw in range(KW)]             # 9 x (B,C,H,W)
    patches = jnp.stack(taps, axis=1)                            # (B,9,C,H,W)
    patches = jnp.transpose(patches, (0, 3, 4, 1, 2))            # (B,H,W,9,C)
    patches = patches.reshape(B, HW, K_PATCH)                    # tap-major, then c
    # zero-pad contraction dim to 128 (lane-dense patch loads) + bf16 cast
    patches = jnp.pad(patches, ((0, 0), (0, 0), (0, K_PAD - K_PATCH)))
    patches = patches.astype(jnp.bfloat16)                       # (B, HW, K_PAD)

    flops = B * (2 * HW * K_PAD * C_FEAT + 2 * HW * C_FEAT + 2 * C_FEAT * OUT_PAD)
    bytes_accessed = (B * HW * K_PAD * 2                          # patches (bf16)
                      + K_PAD * C_FEAT * 2 + C_FEAT * 4           # conv w + b
                      + C_FEAT * OUT_PAD * 4 + OUT_PAD * 4        # cls w + b
                      + B * OUT_PAD * 4)                          # logits out

    out = pl.pallas_call(
        fused_forward_kernel,
        out_shape=jax.ShapeDtypeStruct((B, 1, OUT_PAD), jnp.float32),
        grid_spec=pltpu.PrefetchScalarGridSpec(
            num_scalar_prefetch=0,
            grid=(B,),
            in_specs=[
                # TODO(synk): at real DenseNet feature-map sizes, tile HW and
                # re-introduce a pooled-sum accumulator ("arbitrary" axis) so
                # VMEM stays bounded; on v7x (64 MiB VMEM) that threshold is
                # roughly half of the one that still fits on v5e/v6e.
                pl.BlockSpec((1, HW, K_PAD), lambda b: (b, 0, 0)),
                pl.BlockSpec((K_PAD, C_FEAT), lambda b: (0, 0)),
                pl.BlockSpec((1, C_FEAT), lambda b: (0, 0)),
                pl.BlockSpec((C_FEAT, OUT_PAD), lambda b: (0, 0)),
                pl.BlockSpec((1, OUT_PAD), lambda b: (0, 0)),
            ],
            out_specs=pl.BlockSpec((1, 1, OUT_PAD), lambda b: (b, 0, 0)),
        ),
        compiler_params=pltpu.CompilerParams(
            dimension_semantics=("parallel",)),
        cost_estimate=pl.CostEstimate(flops=flops, transcendentals=0,
                                      bytes_accessed=bytes_accessed),
    )(patches, wconv_kpad_bf16, bconv_1c, wcls_pad, bcls_pad)

    return out.reshape(B, OUT_PAD)[:, :NUM_OUT]


# ---- pure-JAX reference (for correctness check) ----------------------------
def reference_forward(x, wconv_oihw, bconv, wcls_oc, bcls):
    # mirror the kernel's bf16 rounding of the conv inputs
    xb = x.astype(jnp.bfloat16).astype(jnp.float32)
    wb = wconv_oihw.astype(jnp.bfloat16).astype(jnp.float32)
    y = jax.lax.conv_general_dilated(
        xb, wb, window_strides=(1, 1), padding='SAME',
        dimension_numbers=('NCHW', 'OIHW', 'NCHW'),
        precision=jax.lax.Precision.HIGHEST)
    y = y + bconv.reshape(1, C_FEAT, 1, 1)
    y = jnp.maximum(y, 0.0)
    pooled = y.mean(axis=(2, 3))                         # (B, C_FEAT)
    return jnp.dot(pooled, wcls_oc.T,
                   precision=jax.lax.Precision.HIGHEST) + bcls


if __name__ == "__main__":
    key = jax.random.PRNGKey(0)
    kx, kwc, kbc, kwl, kbl = jax.random.split(key, 5)

    # input (NCHW, like PyTorch)
    x = jax.random.normal(kx, (B, C_IN, H, W), dtype=jnp.float32)

    # synthetic "features" conv weights, PyTorch layout (O, I, KH, KW)
    wconv_oihw = jax.random.normal(kwc, (C_FEAT, C_IN, KH, KW),
                                   dtype=jnp.float32) * (1.0 / (C_IN * KH * KW) ** 0.5)
    bconv = jax.random.normal(kbc, (C_FEAT,), dtype=jnp.float32) * 0.1

    # classifier Linear weights, PyTorch layout (out_features, in_features)
    wcls_oc = jax.random.normal(kwl, (NUM_OUT, C_FEAT),
                                dtype=jnp.float32) * (1.0 / C_FEAT ** 0.5)
    bcls = jax.random.normal(kbl, (NUM_OUT,), dtype=jnp.float32) * 0.1

    # ---- kernel-friendly layouts (built once, outside the hot path) --------
    # conv weight: tap-major-then-channel rows (matches wrapper im2col column
    # order), zero-padded to K_PAD rows, bf16
    wconv_km = jnp.transpose(wconv_oihw, (2, 3, 1, 0)).reshape(K_PATCH, C_FEAT)
    wconv_kpad_bf16 = jnp.zeros((K_PAD, C_FEAT), jnp.float32) \
                         .at[:K_PATCH, :].set(wconv_km).astype(jnp.bfloat16)
    bconv_1c = bconv.reshape(1, C_FEAT)
    # classifier: fold the 1/(H*W) pooling scale in; pad lanes to 128 (zeros)
    wcls_scaled = (wcls_oc.T * (1.0 / (H * W))).astype(jnp.float32)  # (C_FEAT, NUM_OUT)
    wcls_pad = jnp.zeros((C_FEAT, OUT_PAD), jnp.float32).at[:, :NUM_OUT].set(wcls_scaled)
    bcls_pad = jnp.zeros((1, OUT_PAD), jnp.float32).at[0, :NUM_OUT].set(bcls)

    logits = model_forward(x, wconv_kpad_bf16, bconv_1c, wcls_pad, bcls_pad)
    logits = jax.block_until_ready(logits)

    ref = reference_forward(x, wconv_oihw, bconv, wcls_oc, bcls)
    assert logits.shape == (B, NUM_OUT)
    assert jnp.allclose(logits, ref, rtol=2e-2, atol=2e-2), "mismatch vs reference"

    # TODO(synk): uncertain_logits_to_probs / sigmoid belongs to .infer(), not
    # forward(); forward returns raw logits as in the PyTorch module.
    print("KERNEL_OK")
</pallas_src>

<mosaic_0001>
module attributes {stable_mosaic.version = 11 : i64} {
  func.func @fused_forward_kernel(%arg0: i32, %arg1: memref<1x256x128xbf16, #tpu.memory_space<vmem>>, %arg2: memref<128x32xbf16, #tpu.memory_space<vmem>>, %arg3: memref<1x32xf32, #tpu.memory_space<vmem>>, %arg4: memref<32x128xf32, #tpu.memory_space<vmem>>, %arg5: memref<1x128xf32, #tpu.memory_space<vmem>>, %arg6: memref<1x1x128xf32, #tpu.memory_space<vmem>>) attributes {dimension_semantics = [#tpu.dimension_semantics<parallel>], iteration_bounds = array<i64: 2>, scalar_prefetch = 0 : i64, scratch_operands = 0 : i64, tpu.core_type = #tpu.core_type<tc>, window_params = [{transform_indices = @transform_0, window_bounds = array<i64: 1, 256, 128>}, {pipeline_mode = #tpu.pipeline_mode<synchronous>, transform_indices = @transform_1, window_bounds = array<i64: 128, 32>}, {pipeline_mode = #tpu.pipeline_mode<synchronous>, transform_indices = @transform_2, window_bounds = array<i64: 1, 32>}, {pipeline_mode = #tpu.pipeline_mode<synchronous>, transform_indices = @transform_3, window_bounds = array<i64: 32, 128>}, {pipeline_mode = #tpu.pipeline_mode<synchronous>, transform_indices = @transform_4, window_bounds = array<i64: 1, 128>}, {transform_indices = @transform_5, window_bounds = array<i64: 1, 1, 128>}]} {
    %c0 = arith.constant 0 : index
    %c0_0 = arith.constant 0 : index
    %c0_1 = arith.constant 0 : index
    %0 = vector.load %arg1[%c0, %c0_0, %c0_1] : memref<1x256x128xbf16, #tpu.memory_space<vmem>>, vector<1x256x128xbf16>
    %1 = vector.shape_cast %0 : vector<1x256x128xbf16> to vector<256x128xbf16>
    %c0_2 = arith.constant 0 : index
    %c0_3 = arith.constant 0 : index
    %2 = vector.load %arg2[%c0_2, %c0_3] : memref<128x32xbf16, #tpu.memory_space<vmem>>, vector<128x32xbf16>
    %cst = arith.constant dense<0.000000e+00> : vector<256x32xf32>
    %3 = tpu.matmul %1, %2, %cst {dimension_numbers = #tpu.dot_dimension_numbers<[1], [0], [0], [1], [0, 0, 1, 1], [], []>} : vector<256x128xbf16>, vector<128x32xbf16>, vector<256x32xf32> -> vector<256x32xf32>
    %c0_4 = arith.constant 0 : index
    %c0_5 = arith.constant 0 : index
    %4 = vector.load %arg3[%c0_4, %c0_5] : memref<1x32xf32, #tpu.memory_space<vmem>>, vector<1x32xf32>
    %5 = vector.broadcast %4 : vector<1x32xf32> to vector<256x32xf32>
    %6 = arith.addf %3, %5 : vector<256x32xf32>
    %cst_6 = arith.constant 0.000000e+00 : f32
    %7 = vector.broadcast %cst_6 : f32 to vector<256x32xf32>
    %8 = arith.maximumf %6, %7 : vector<256x32xf32>
    %cst_7 = arith.constant 1.000000e+00 : f32
    %9 = vector.broadcast %cst_7 : f32 to vector<1x256xf32>
    %cst_8 = arith.constant dense<0.000000e+00> : vector<1x32xf32>
    %10 = tpu.matmul %9, %8, %cst_8 {dimension_numbers = #tpu.dot_dimension_numbers<[1], [0], [0], [1], [0, 0, 1, 1], [], []>} : vector<1x256xf32>, vector<256x32xf32>, vector<1x32xf32> -> vector<1x32xf32>
    %c0_9 = arith.constant 0 : index
    %c0_10 = arith.constant 0 : index
    %11 = vector.load %arg4[%c0_9, %c0_10] : memref<32x128xf32, #tpu.memory_space<vmem>>, vector<32x128xf32>
    %cst_11 = arith.constant dense<0.000000e+00> : vector<1x128xf32>
    %12 = tpu.matmul %10, %11, %cst_11 {dimension_numbers = #tpu.dot_dimension_numbers<[1], [0], [0], [1], [0, 0, 1, 1], [], []>} : vector<1x32xf32>, vector<32x128xf32>, vector<1x128xf32> -> vector<1x128xf32>
    %c0_12 = arith.constant 0 : index
    %c0_13 = arith.constant 0 : index
    %13 = vector.load %arg5[%c0_12, %c0_13] : memref<1x128xf32, #tpu.memory_space<vmem>>, vector<1x128xf32>
    %14 = arith.addf %12, %13 : vector<1x128xf32>
    %c0_14 = arith.constant 0 : index
    %c0_15 = arith.constant 0 : index
    %c0_16 = arith.constant 0 : index
    %15 = vector.load %arg6[%c0_14, %c0_15, %c0_16] : memref<1x1x128xf32, #tpu.memory_space<vmem>>, vector<1x1x128xf32>
    %16 = vector.shape_cast %15 : vector<1x1x128xf32> to vector<1x128xf32>
    %17 = vector.shape_cast %14 : vector<1x128xf32> to vector<1x1x128xf32>
    tpu.vector_store %arg6[%c0_14, %c0_15, %c0_16], %17 {strides = array<i32>} : memref<1x1x128xf32, #tpu.memory_space<vmem>>, vector<1x1x128xf32>,
    return
  }
  func.func @transform_0(%arg0: i32) -> (i32, i32, i32) {
    %c0_i32 = arith.constant 0 : i32
    %c0_i32_0 = arith.constant 0 : i32
    %c0_i32_1 = arith.constant 0 : i32
    return %arg0, %c0_i32, %c0_i32_0 : i32, i32, i32
  }
  func.func @transform_1(%arg0: i32) -> (i32, i32) {
    %c0_i32 = arith.constant 0 : i32
    %c0_i32_0 = arith.constant 0 : i32
    %c0_i32_1 = arith.constant 0 : i32
    return %c0_i32, %c0_i32_0 : i32, i32
  }
  func.func @transform_2(%arg0: i32) -> (i32, i32) {
    %c0_i32 = arith.constant 0 : i32
    %c0_i32_0 = arith.constant 0 : i32
    %c0_i32_1 = arith.constant 0 : i32
    return %c0_i32, %c0_i32_0 : i32, i32
  }
  func.func @transform_3(%arg0: i32) -> (i32, i32) {
    %c0_i32 = arith.constant 0 : i32
    %c0_i32_0 = arith.constant 0 : i32
    %c0_i32_1 = arith.constant 0 : i32
    return %c0_i32, %c0_i32_0 : i32, i32
  }
  func.func @transform_4(%arg0: i32) -> (i32, i32) {
    %c0_i32 = arith.constant 0 : i32
    %c0_i32_0 = arith.constant 0 : i32
    %c0_i32_1 = arith.constant 0 : i32
    return %c0_i32, %c0_i32_0 : i32, i32
  }
  func.func @transform_5(%arg0: i32) -> (i32, i32, i32) {
    %c0_i32 = arith.constant 0 : i32
    %c0_i32_0 = arith.constant 0 : i32
    %c0_i32_1 = arith.constant 0 : i32
    return %arg0, %c0_i32, %c0_i32_0 : i32, i32, i32
  }
}

</mosaic_0001>

<llo_original>
// kernel: model_forward.1
$region0: #{model_forward.1}
  #allocation0 [shape = 'u32[]', space=smem, size = 0x4, offset = 0x4, fixed_abs, tag = 'smem constant byte address 0x4 - core index']
  #allocation1 [shape = 'u32[72,128]{1,0:T(1,128)}', space=vmem, size = 0x9000, scoped, tag = 'internal scratch']
  %s0 = inlined_call_operand.vmem [shape: bf16[2,256,128], index: 0, kind: input, shape index: {}]
  %s1 = inlined_call_operand.vmem [shape: bf16[128,32], index: 1, kind: input, shape index: {}]
  %s2 = inlined_call_operand.vmem [shape: f32[1,32], index: 2, kind: input, shape index: {}]
  %s3 = inlined_call_operand.vmem [shape: f32[32,128], index: 3, kind: input, shape index: {}]
  %s4 = inlined_call_operand.vmem [shape: f32[1,128], index: 4, kind: input, shape index: {}]
  %s5 = inlined_call_operand.hbm [shape: f32[2,1,128], index: 5, kind: output, shape index: {}]
  %s6 = sld [smem:[#allocation0]]
  $region53: #{model_forward.1} parent=0
    _
  %s8 = ssub.s32 1, %s6
  %s9 = scalar_select 0, %s8, %s6
  $region1: #{model_forward.1} parent=0
    #allocation2 [shape = 'u8[1024]{0}', space=vmem, size = 0x400, scoped, tag = 'output window, operand 0']
    #allocation3 [shape = 's32[2]{0}', space=sflag, size = 0x8, scoped, tag = 'scoped memory for model_forward.1']
    %10 = vsyncpa [#allocation3], 0
    %s11 = scalar_lea.sflag [#allocation3], 1
    %12 = vsyncpa %s11, 0
    loop: start=0, step=1, limit=4
    $region2: #{model_forward.1} parent=1 // loop_pre_header
      _
    $region3: #{model_forward.1} parent=1 // loop_header
      %s14 = sphi 0, %s18
      %p15 = scmp.ge.s32.totalorder %s14, 4
      %s24 = sphi 0, %s26
      %s27 = sphi 0, %s24
      %s28 = sphi 0, %s27
      %s44 = sphi 0, %s28
      %s48 = sphi 0, %s48
      %s50 = sphi 0, %s48
      %s51 = sphi 0, %s50
      %s65 = sphi 0, %s51
      %s69 = sphi 0, %s69
      %s71 = sphi 0, %s69
      %s72 = sphi 0, %s71
      %s86 = sphi 0, %s72
      %s90 = sphi 0, %s90
      %s92 = sphi 0, %s90
      %s93 = sphi 0, %s92
      %s107 = sphi 0, %s93
      %s111 = sphi 0, %s111
      %s113 = sphi 0, %s111
      %s114 = sphi 0, %s113
      %s128 = sphi 0, %s114
      %s134 = sphi 0, %s136
      %s137 = sphi 0, %s134
      %s138 = sphi 0, %s137
      %s154 = sphi 0, %s138
    $region4: #{model_forward.1} parent=1 // loop_header_branch
      %17 = sbr.rel (%p15) target = $region8
    $region5: #{model_forward.1} parent=1 // loop_body
      %s19 = ssub.s32 %s14, 1
      %s20 = ssub.s32 %s14, 2
      %s21 = sadd.s32 %s14, 1
      %s22 = ssub.s32 %s14, %s21
      %p23 = scmp.eq.s32.totalorder %s22, 0
      %s25 = sadd.s32 %s24, 1
      %s26 = scalar_select %p23, %s24, %s25
      %p29 = pneg %p23
      %p30 = scmp.eq.s32.totalorder %s14, 1
      %p31 = por %p29, %p30
      %p32 = scmp.ne.s32.totalorder %s24, %s27
      %p33 = scmp.eq.s32.totalorder %s14, 0
      %p34 = por %p32, %p33
      %p35 = scmp.ne.s32.totalorder %s24, %s27
      %p36 = scmp.eq.s32.totalorder %s19, 1
      %p37 = por %p35, %p36
      %p38 = scmp.ne.s32.totalorder %s27, %s28
      %p39 = scmp.eq.s32.totalorder %s19, 0
      %p40 = por %p38, %p39
      %p41 = scmp.ne.s32.totalorder %s27, %s28
      %p42 = scmp.eq.s32.totalorder %s20, 1
      %p43 = por %p41, %p42
      %p45 = scmp.ne.s32.totalorder %s28, %s44
      %p46 = scmp.eq.s32.totalorder %s20, 0
      %p47 = por %p45, %p46
      %s49 = sadd.s32 %s48, 1
      %p52 = scmp.eq.s32.totalorder %s14, 1
      %p53 = scmp.ne.s32.totalorder %s48, %s50
      %p54 = scmp.eq.s32.totalorder %s14, 0
      %p55 = por %p53, %p54
      %p56 = scmp.ne.s32.totalorder %s48, %s50
      %p57 = scmp.eq.s32.totalorder %s19, 1
      %p58 = por %p56, %p57
      %p59 = scmp.ne.s32.totalorder %s50, %s51
      %p60 = scmp.eq.s32.totalorder %s19, 0
      %p61 = por %p59, %p60
      %p62 = scmp.ne.s32.totalorder %s50, %s51
      %p63 = scmp.eq.s32.totalorder %s20, 1
      %p64 = por %p62, %p63
      %p66 = scmp.ne.s32.totalorder %s51, %s65
      %p67 = scmp.eq.s32.totalorder %s20, 0
      %p68 = por %p66, %p67
      %s70 = sadd.s32 %s69, 1
      %p73 = scmp.eq.s32.totalorder %s14, 1
      %p74 = scmp.ne.s32.totalorder %s69, %s71
      %p75 = scmp.eq.s32.totalorder %s14, 0
      %p76 = por %p74, %p75
      %p77 = scmp.ne.s32.totalorder %s69, %s71
      %p78 = scmp.eq.s32.totalorder %s19, 1
      %p79 = por %p77, %p78
      %p80 = scmp.ne.s32.totalorder %s71, %s72
      %p81 = scmp.eq.s32.totalorder %s19, 0
      %p82 = por %p80, %p81
      %p83 = scmp.ne.s32.totalorder %s71, %s72
      %p84 = scmp.eq.s32.totalorder %s20, 1
      %p85 = por %p83, %p84
      %p87 = scmp.ne.s32.totalorder %s72, %s86
      %p88 = scmp.eq.s32.totalorder %s20, 0
      %p89 = por %p87, %p88
      %s91 = sadd.s32 %s90, 1
      %p94 = scmp.eq.s32.totalorder %s14, 1
      %p95 = scmp.ne.s32.totalorder %s90, %s92
      %p96 = scmp.eq.s32.totalorder %s14, 0
      %p97 = por %p95, %p96
      %p98 = scmp.ne.s32.totalorder %s90, %s92
      %p99 = scmp.eq.s32.totalorder %s19, 1
      %p100 = por %p98, %p99
      %p101 = scmp.ne.s32.totalorder %s92, %s93
      %p102 = scmp.eq.s32.totalorder %s19, 0
      %p103 = por %p101, %p102
      %p104 = scmp.ne.s32.totalorder %s92, %s93
      %p105 = scmp.eq.s32.totalorder %s20, 1
      %p106 = por %p104, %p105
      %p108 = scmp.ne.s32.totalorder %s93, %s107
      %p109 = scmp.eq.s32.totalorder %s20, 0
      %p110 = por %p108, %p109
      %s112 = sadd.s32 %s111, 1
      %p115 = scmp.eq.s32.totalorder %s14, 1
      %p116 = scmp.ne.s32.totalorder %s111, %s113
      %p117 = scmp.eq.s32.totalorder %s14, 0
      %p118 = por %p116, %p117
      %p119 = scmp.ne.s32.totalorder %s111, %s113
      %p120 = scmp.eq.s32.totalorder %s19, 1
      %p121 = por %p119, %p120
      %p122 = scmp.ne.s32.totalorder %s113, %s114
      %p123 = scmp.eq.s32.totalorder %s19, 0
      %p124 = por %p122, %p123
      %p125 = scmp.ne.s32.totalorder %s113, %s114
      %p126 = scmp.eq.s32.totalorder %s20, 1
      %p127 = por %p125, %p126
      %p129 = scmp.ne.s32.totalorder %s114, %s128
      %p130 = scmp.eq.s32.totalorder %s20, 0
      %p131 = por %p129, %p130
      %s132 = ssub.s32 %s14, %s21
      %p133 = scmp.eq.s32.totalorder %s132, 0
      %s135 = sadd.s32 %s134, 1
      %s136 = scalar_select %p133, %s134, %s135
      %p139 = pneg %p133
      %p140 = scmp.eq.s32.totalorder %s14, 1
      %p141 = por %p139, %p140
      %p142 = scmp.ne.s32.totalorder %s134, %s137
      %p143 = scmp.eq.s32.totalorder %s14, 0
      %p144 = por %p142, %p143
      %p145 = scmp.ne.s32.totalorder %s134, %s137
      %p146 = scmp.eq.s32.totalorder %s19, 1
      %p147 = por %p145, %p146
      %p148 = scmp.ne.s32.totalorder %s137, %s138
      %p149 = scmp.eq.s32.totalorder %s19, 0
      %p150 = por %p148, %p149
      %p151 = scmp.ne.s32.totalorder %s137, %s138
      %p152 = scmp.eq.s32.totalorder %s20, 1
      %p153 = por %p151, %p152
      %p155 = scmp.ne.s32.totalorder %s138, %s154
      %p156 = scmp.eq.s32.totalorder %s20, 0
      %p157 = por %p155, %p156
      %p158 = scmp.le.s32.totalorder 1, %s14
      %p159 = scmp.lt.s32.totalorder %s14, 3
      %p160 = pnand %p158, %p159
      %p161 = pneg %p160
      // Predicated region
      $region9: #{model_forward.1} parent=5 // pred_check
        _
      $region10: #{model_forward.1} parent=5 // pred_check_branch
        %163 = sbr.rel (%p160) target = $region12
      $region11: #{model_forward.1} parent=5 // pred_region
        %s164 = ssub.s32 %s14, 1
        // Predicated region
        $region13: #{model_forward.1} parent=11 // pred_check
          %p165 = pneg %p61
        $region14: #{model_forward.1} parent=11 // pred_check_branch
          %167 = sbr.rel (%p165) target = $region16
        $region15: #{model_forward.1} parent=11 // pred_region
          _
        $region16: #{model_forward.1} parent=11 // pred_fallthru
          _
        // Predicated region
        $region17: #{model_forward.1} parent=11 // pred_check
          %p168 = pneg %p82
        $region18: #{model_forward.1} parent=11 // pred_check_branch
          %170 = sbr.rel (%p168) target = $region20
        $region19: #{model_forward.1} parent=11 // pred_region
          _
        $region20: #{model_forward.1} parent=11 // pred_fallthru
          _
        // Predicated region
        $region21: #{model_forward.1} parent=11 // pred_check
          %p171 = pneg %p103
        $region22: #{model_forward.1} parent=11 // pred_check_branch
          %173 = sbr.rel (%p171) target = $region24
        $region23: #{model_forward.1} parent=11 // pred_region
          _
        $region24: #{model_forward.1} parent=11 // pred_fallthru
          _
        // Predicated region
        $region25: #{model_forward.1} parent=11 // pred_check
          %p174 = pneg %p124
        $region26: #{model_forward.1} parent=11 // pred_check_branch
          %176 = sbr.rel (%p174) target = $region28
        $region27: #{model_forward.1} parent=11 // pred_region
          _
        $region28: #{model_forward.1} parent=11 // pred_fallthru
          _
      $region12: #{model_forward.1} parent=5 // pred_fallthru
        _
      %p177 = scmp.lt.s32.totalorder %s14, 2
      // Predicated region
      $region29: #{model_forward.1} parent=5 // pred_check
        %p178 = pneg %p177
      $region30: #{model_forward.1} parent=5 // pred_check_branch
        %180 = sbr.rel (%p178) target = $region32
      $region31: #{model_forward.1} parent=5 // pred_region
        // Predicated region
        $region33: #{model_forward.1} parent=31 // pred_check
          %p181 = pneg %p34
        $region34: #{model_forward.1} parent=31 // pred_check_branch
          %183 = sbr.rel (%p181) target = $region36
        $region35: #{model_forward.1} parent=31 // pred_region
          %p184 = scmp.lt.s32.totalorder %s14, 1
          %s185 = scalar_select %p184, %s14, 1
          %s186 = smul.addr %s185, 32
          %s187 = smul.addr %s186, 4
          %s188 = scalar_lea.vmem %s0, %s187
        $region36: #{model_forward.1} parent=31 // pred_fallthru
          _
      $region32: #{model_forward.1} parent=5 // pred_fallthru
        _
      %p189 = scmp.le.s32.totalorder 1, %s14
      %p190 = scmp.lt.s32.totalorder %s14, 3
      %p191 = pnand %p189, %p190
      %p192 = pneg %p191
      // Predicated region
      $region37: #{model_forward.1} parent=5 // pred_check
        _
      $region38: #{model_forward.1} parent=5 // pred_check_branch
        %194 = sbr.rel (%p191) target = $region40
      $region39: #{model_forward.1} parent=5 // pred_region
        %s195 = ssub.s32 %s14, 1
        %p196 = scmp.lt.s32.totalorder %s19, 1
        %s197 = scalar_select %p196, %s19, 1
        %s198 = smul.addr %s197, 32
        %s199 = smul.addr %s198, 4
        %s200 = scalar_lea.vmem %s0, %s199
        %p201 = pneg %p40
        %p202 = pneg %p37
        %p203 = pneg %p61
        %p204 = pneg %p58
        %p205 = pneg %p82
        %p206 = pneg %p79
        %p207 = pneg %p103
        %p208 = pneg %p100
        %p209 = pneg %p124
        %p210 = pneg %p121
        %p211 = pneg %p150
        %p212 = pneg %p147
        %s213 = sand.u32 %s137, 1
        %s214 = scalar_lea.sflag [#allocation3], %s213
        %s215 = sand.u32 %s137, 1
        %s216 = scalar_lea.vmem [#allocation2], %s215
        %p217 = scmp.lt.s32.totalorder %s19, 1
        %s218 = scalar_select %p217, %s19, 1
        %s219 = smul.addr %s218, 32
        %s220 = smul.addr %s219, 4
        %s221 = scalar_lea.vmem %s0, %s220
        %v222 = vld [vmem:[%s221] sm:$0xf]
        %v223 = vld [vmem:[%s221 + $0x4] sm:$0xf]
        %v224 = vld [vmem:[%s221 + $0x8] sm:$0xf]
        %v225 = vld [vmem:[%s221 + $0xc] sm:$0xf]
        %v226 = vld [vmem:[%s221 + $0x10] sm:$0xf]
        %v227 = vld [vmem:[%s221 + $0x14] sm:$0xf]
        %v228 = vld [vmem:[%s221 + $0x18] sm:$0xf]
        %v229 = vld [vmem:[%s221 + $0x1c] sm:$0xf]
        %v230 = vld [vmem:[%s221 + $0x20] sm:$0xf]
        %v231 = vld [vmem:[%s221 + $0x24] sm:$0xf]
        %v232 = vld [vmem:[%s221 + $0x28] sm:$0xf]
        %v233 = vld [vmem:[%s221 + $0x2c] sm:$0xf]
        %v234 = vld [vmem:[%s221 + $0x30] sm:$0xf]
        %v235 = vld [vmem:[%s221 + $0x34] sm:$0xf]
        %v236 = vld [vmem:[%s221 + $0x38] sm:$0xf]
        %v237 = vld [vmem:[%s221 + $0x3c] sm:$0xf]
        %v238 = vld [vmem:[%s221 + $0x40] sm:$0xf]
        %v239 = vld [vmem:[%s221 + $0x44] sm:$0xf]
        %v240 = vld [vmem:[%s221 + $0x48] sm:$0xf]
        %v241 = vld [vmem:[%s221 + $0x4c] sm:$0xf]
        %v242 = vld [vmem:[%s221 + $0x50] sm:$0xf]
        %v243 = vld [vmem:[%s221 + $0x54] sm:$0xf]
        %v244 = vld [vmem:[%s221 + $0x58] sm:$0xf]
        %v245 = vld [vmem:[%s221 + $0x5c] sm:$0xf]
        %v246 = vld [vmem:[%s221 + $0x60] sm:$0xf]
        %v247 = vld [vmem:[%s221 + $0x64] sm:$0xf]
        %v248 = vld [vmem:[%s221 + $0x68] sm:$0xf]
        %v249 = vld [vmem:[%s221 + $0x6c] sm:$0xf]
        %v250 = vld [vmem:[%s221 + $0x70] sm:$0xf]
        %v251 = vld [vmem:[%s221 + $0x74] sm:$0xf]
        %v252 = vld [vmem:[%s221 + $0x78] sm:$0xf]
        %v253 = vld [vmem:[%s221 + $0x7c] sm:$0xf]
        %v254 = vld [vmem:[%s1] sm:$0xf]
        %v255 = vld [vmem:[%s1 + $0x4] sm:$0xf]
        %v256 = vld [vmem:[%s1 + $0x8] sm:$0xf]
        %v257 = vld [vmem:[%s1 + $0xc] sm:$0xf]
        %v258 = vld [vmem:[%s1 + $0x10] sm:$0xf]
        %v259 = vld [vmem:[%s1 + $0x14] sm:$0xf]
        %v260 = vld [vmem:[%s1 + $0x18] sm:$0xf]
        %v261 = vld [vmem:[%s1 + $0x1c] sm:$0xf]
        %v262 = vld [vmem:[%s1 + $0x20] sm:$0xf]
        %v263 = vld [vmem:[%s1 + $0x24] sm:$0xf]
        %v264 = vld [vmem:[%s1 + $0x28] sm:$0xf]
        %v265 = vld [vmem:[%s1 + $0x2c] sm:$0xf]
        %v266 = vld [vmem:[%s1 + $0x30] sm:$0xf]
        %v267 = vld [vmem:[%s1 + $0x34] sm:$0xf]
        %v268 = vld [vmem:[%s1 + $0x38] sm:$0xf]
        %v269 = vld [vmem:[%s1 + $0x3c] sm:$0xf]
        %v270 = vld [vmem:[%s2] sm:$0x1]
        %v272 = vperm.slane %v270, 0
        %v306 = vunpack.c.l.b16 %v222
        %v307 = vunpack.c.l.b16 %v223
        %v308 = vunpack.c.l.b16 %v224
        %v309 = vunpack.c.l.b16 %v225
        %v310 = vunpack.c.l.b16 %v226
        %v311 = vunpack.c.l.b16 %v227
        %v312 = vunpack.c.l.b16 %v228
        %v313 = vunpack.c.l.b16 %v229
        %v314 = vunpack.c.l.b16 %v230
        %v315 = vunpack.c.l.b16 %v231
        %v316 = vunpack.c.l.b16 %v232
        %v317 = vunpack.c.l.b16 %v233
        %v318 = vunpack.c.l.b16 %v234
        %v319 = vunpack.c.l.b16 %v235
        %v320 = vunpack.c.l.b16 %v236
        %v321 = vunpack.c.l.b16 %v237
        %v322 = vunpack.c.l.b16 %v238
        %v323 = vunpack.c.l.b16 %v239
        %v324 = vunpack.c.l.b16 %v240
        %v325 = vunpack.c.l.b16 %v241
        %v326 = vunpack.c.l.b16 %v242
        %v327 = vunpack.c.l.b16 %v243
        %v328 = vunpack.c.l.b16 %v244
        %v329 = vunpack.c.l.b16 %v245
        %v330 = vunpack.c.l.b16 %v246
        %v331 = vunpack.c.l.b16 %v247
        %v332 = vunpack.c.l.b16 %v248
        %v333 = vunpack.c.l.b16 %v249
        %v334 = vunpack.c.l.b16 %v250
        %v335 = vunpack.c.l.b16 %v251
        %v336 = vunpack.c.l.b16 %v252
        %v337 = vunpack.c.l.b16 %v253
        %v338 = vpack.c.b16 %v307, %v306
        %v339 = vpack.c.b16 %v309, %v308
        %v340 = vpack.c.b16 %v311, %v310
        %v341 = vpack.c.b16 %v313, %v312
        %v342 = vpack.c.b16 %v315, %v314
        %v343 = vpack.c.b16 %v317, %v316
        %v344 = vpack.c.b16 %v319, %v318
        %v345 = vpack.c.b16 %v321, %v320
        %v346 = vpack.c.b16 %v323, %v322
        %v347 = vpack.c.b16 %v325, %v324
        %v348 = vpack.c.b16 %v327, %v326
        %v349 = vpack.c.b16 %v329, %v328
        %v350 = vpack.c.b16 %v331, %v330
        %v351 = vpack.c.b16 %v333, %v332
        %v352 = vpack.c.b16 %v335, %v334
        %v353 = vpack.c.b16 %v337, %v336
        %v386 = vunpack.c.l.b16 %v254
        %v387 = vunpack.c.l.b16 %v255
        %v388 = vunpack.c.l.b16 %v256
        %v389 = vunpack.c.l.b16 %v257
        %v390 = vunpack.c.l.b16 %v258
        %v391 = vunpack.c.l.b16 %v259
        %v392 = vunpack.c.l.b16 %v260
        %v393 = vunpack.c.l.b16 %v261
        %v394 = vunpack.c.l.b16 %v262
        %v395 = vunpack.c.l.b16 %v263
        %v396 = vunpack.c.l.b16 %v264
        %v397 = vunpack.c.l.b16 %v265
        %v398 = vunpack.c.l.b16 %v266
        %v399 = vunpack.c.l.b16 %v267
        %v400 = vunpack.c.l.b16 %v268
        %v401 = vunpack.c.l.b16 %v269
        %v402 = vpack.c.b16 %v387, %v386
        %v403 = vpack.c.b16 %v389, %v388
        %v404 = vpack.c.b16 %v391, %v390
        %v405 = vpack.c.b16 %v393, %v392
        %v406 = vpack.c.b16 %v395, %v394
        %v407 = vpack.c.b16 %v397, %v396
        %v408 = vpack.c.b16 %v399, %v398
        %v409 = vpack.c.b16 %v401, %v400
        %418 = vmatpush.bf16.msra.mxu0 %v409
        %419 = vmatpush.bf16.msra.mxu0 %v408
        %420 = vmatpush.bf16.msra.mxu0 %v407
        %421 = vmatpush.bf16.msra.mxu0 %v406
        %422 = vmatpush.bf16.msra.mxu0 %v405
        %423 = vmatpush.bf16.msra.mxu0 %v404
        %424 = vmatpush.bf16.msra.mxu0 %v403
        %425 = vmatpush.bf16.msra.mxu0 %v402
        %426 = vmatmul.bf16.gmra.mxu0 %v338
        %v427 = vpop.f32.mrf.mxu0
        %v428 = vadd.f32 %v272, %v427
        %v429 = vpop.f32.mrf.mxu0
        %v430 = vadd.f32 %v272, %v429
        %431 = vmatmul.bf16.gmra.mxu0 %v339
        %v432 = vpop.f32.mrf.mxu0
        %v433 = vadd.f32 %v272, %v432
        %v434 = vpop.f32.mrf.mxu0
        %v435 = vadd.f32 %v272, %v434
        %436 = vmatmul.bf16.gmra.mxu0 %v340
        %v437 = vpop.f32.mrf.mxu0
        %v438 = vadd.f32 %v272, %v437
        %v439 = vpop.f32.mrf.mxu0
        %v440 = vadd.f32 %v272, %v439
        %441 = vmatmul.bf16.gmra.mxu0 %v341
        %v442 = vpop.f32.mrf.mxu0
        %v443 = vadd.f32 %v272, %v442
        %v444 = vpop.f32.mrf.mxu0
        %v445 = vadd.f32 %v272, %v444
        %446 = vmatmul.bf16.gmra.mxu0 %v342
        %v447 = vpop.f32.mrf.mxu0
        %v448 = vadd.f32 %v272, %v447
        %v449 = vpop.f32.mrf.mxu0
        %v450 = vadd.f32 %v272, %v449
        %451 = vmatmul.bf16.gmra.mxu0 %v343
        %v452 = vpop.f32.mrf.mxu0
        %v453 = vadd.f32 %v272, %v452
        %v454 = vpop.f32.mrf.mxu0
        %v455 = vadd.f32 %v272, %v454
        %456 = vmatmul.bf16.gmra.mxu0 %v344
        %v457 = vpop.f32.mrf.mxu0
        %v458 = vadd.f32 %v272, %v457
        %v459 = vpop.f32.mrf.mxu0
        %v460 = vadd.f32 %v272, %v459
        %461 = vmatmul.bf16.gmra.mxu0 %v345
        %v462 = vpop.f32.mrf.mxu0
        %v463 = vadd.f32 %v272, %v462
        %v464 = vpop.f32.mrf.mxu0
        %v465 = vadd.f32 %v272, %v464
        %466 = vmatmul.bf16.gmra.mxu0 %v346
        %v467 = vpop.f32.mrf.mxu0
        %v468 = vadd.f32 %v272, %v467
        %v469 = vpop.f32.mrf.mxu0
        %v470 = vadd.f32 %v272, %v469
        %471 = vmatmul.bf16.gmra.mxu0 %v347
        %v472 = vpop.f32.mrf.mxu0
        %v473 = vadd.f32 %v272, %v472
        %v474 = vpop.f32.mrf.mxu0
        %v475 = vadd.f32 %v272, %v474
        %476 = vmatmul.bf16.gmra.mxu0 %v348
        %v477 = vpop.f32.mrf.mxu0
        %v478 = vadd.f32 %v272, %v477
        %v479 = vpop.f32.mrf.mxu0
        %v480 = vadd.f32 %v272, %v479
        %481 = vmatmul.bf16.gmra.mxu0 %v349
        %v482 = vpop.f32.mrf.mxu0
        %v483 = vadd.f32 %v272, %v482
        %v484 = vpop.f32.mrf.mxu0
        %v485 = vadd.f32 %v272, %v484
        %486 = vmatmul.bf16.gmra.mxu0 %v350
        %v487 = vpop.f32.mrf.mxu0
        %v488 = vadd.f32 %v272, %v487
        %v489 = vpop.f32.mrf.mxu0
        %v490 = vadd.f32 %v272, %v489
        %491 = vmatmul.bf16.gmra.mxu0 %v351
        %v492 = vpop.f32.mrf.mxu0
        %v493 = vadd.f32 %v272, %v492
        %v494 = vpop.f32.mrf.mxu0
        %v495 = vadd.f32 %v272, %v494
        %496 = vmatmul.bf16.gmra.mxu0 %v352
        %v497 = vpop.f32.mrf.mxu0
        %v498 = vadd.f32 %v272, %v497
        %v499 = vpop.f32.mrf.mxu0
        %v500 = vadd.f32 %v272, %v499
        %501 = vmatmul.bf16.gmra.mxu0 %v353
        %v502 = vpop.f32.mrf.mxu0
        %v503 = vadd.f32 %v272, %v502
        %v504 = vpop.f32.mrf.mxu0
        %v505 = vadd.f32 %v272, %v504
        %506 = vdwg.mxu0
        %v507 = vmax.f32 %v428, 0.0
        %v508 = vmax.f32 %v430, 0.0
        %v509 = vmax.f32 %v433, 0.0
        %v510 = vmax.f32 %v435, 0.0
        %v511 = vmax.f32 %v438, 0.0
        %v512 = vmax.f32 %v440, 0.0
        %v513 = vmax.f32 %v443, 0.0
        %v514 = vmax.f32 %v445, 0.0
        %v515 = vmax.f32 %v448, 0.0
        %v516 = vmax.f32 %v450, 0.0
        %v517 = vmax.f32 %v453, 0.0
        %v518 = vmax.f32 %v455, 0.0
        %v519 = vmax.f32 %v458, 0.0
        %v520 = vmax.f32 %v460, 0.0
        %v521 = vmax.f32 %v463, 0.0
        %v522 = vmax.f32 %v465, 0.0
        %v523 = vmax.f32 %v468, 0.0
        %v524 = vmax.f32 %v470, 0.0
        %v525 = vmax.f32 %v473, 0.0
        %v526 = vmax.f32 %v475, 0.0
        %v527 = vmax.f32 %v478, 0.0
        %v528 = vmax.f32 %v480, 0.0
        %v529 = vmax.f32 %v483, 0.0
        %v530 = vmax.f32 %v485, 0.0
        %v531 = vmax.f32 %v488, 0.0
        %v532 = vmax.f32 %v490, 0.0
        %v533 = vmax.f32 %v493, 0.0
        %v534 = vmax.f32 %v495, 0.0
        %v535 = vmax.f32 %v498, 0.0
        %v536 = vmax.f32 %v500, 0.0
        %v537 = vmax.f32 %v503, 0.0
        %v538 = vmax.f32 %v505, 0.0
        %539 = vmatpush.msra.mxu0 %v522
        %540 = vmatpush.msra.mxu0 %v521
        %541 = vmatpush.msra.mxu0 %v520
        %542 = vmatpush.msra.mxu0 %v519
        %543 = vmatpush.msra.mxu0 %v518
        %544 = vmatpush.msra.mxu0 %v517
        %545 = vmatpush.msra.mxu0 %v516
        %546 = vmatpush.msra.mxu0 %v515
        %547 = vmatpush.msra.mxu0 %v514
        %548 = vmatpush.msra.mxu0 %v513
        %549 = vmatpush.msra.mxu0 %v512
        %550 = vmatpush.msra.mxu0 %v511
        %551 = vmatpush.msra.mxu0 %v510
        %552 = vmatpush.msra.mxu0 %v509
        %553 = vmatpush.msra.mxu0 %v508
        %554 = vmatpush.msra.mxu0 %v507
        %555 = vmatmul.f32.gmra.mxu0 1.0
        %v556 = vpop.f32.mrf.mxu0
        %v557 = vadd.f32 0.0, %v556
        %558 = vdwg.mxu0
        %559 = vmatpush.msra.mxu0 %v538
        %560 = vmatpush.msra.mxu0 %v537
        %561 = vmatpush.msra.mxu0 %v536
        %562 = vmatpush.msra.mxu0 %v535
        %563 = vmatpush.msra.mxu0 %v534
        %564 = vmatpush.msra.mxu0 %v533
        %565 = vmatpush.msra.mxu0 %v532
        %566 = vmatpush.msra.mxu0 %v531
        %567 = vmatpush.msra.mxu0 %v530
        %568 = vmatpush.msra.mxu0 %v529
        %569 = vmatpush.msra.mxu0 %v528
        %570 = vmatpush.msra.mxu0 %v527
        %571 = vmatpush.msra.mxu0 %v526
        %572 = vmatpush.msra.mxu0 %v525
        %573 = vmatpush.msra.mxu0 %v524
        %574 = vmatpush.msra.mxu0 %v523
        %575 = vmatmul.f32.gmra.mxu0 1.0
        %v576 = vpop.f32.mrf.mxu0
        %v577 = vadd.f32 %v557, %v576
        %578 = vdwg.mxu0
        %v579 = vld [vmem:[%s3] sm:$0xff]
        %v580 = vld [vmem:[%s3 + $0x8] sm:$0xff]
        %v581 = vld [vmem:[%s3 + $0x10] sm:$0xff]
        %v582 = vld [vmem:[%s3 + $0x18] sm:$0xff]
        %v583 = vld [vmem:[%s4] sm:$0x1]
        %vm584 = vcmask 261120
        %v586 = vsel %vm584, %v577, 0
        %588 = vmatpush.msra.mxu0 0.0
        %589 = vmatpush.msra.mxu0 0.0
        %590 = vmatpush.msra.mxu0 0.0
        %591 = vmatpush.msra.mxu0 0.0
        %592 = vmatpush.msra.mxu0 0.0
        %593 = vmatpush.msra.mxu0 0.0
        %594 = vmatpush.msra.mxu0 0.0
        %595 = vmatpush.msra.mxu0 0.0
        %596 = vmatpush.msra.mxu0 0.0
        %597 = vmatpush.msra.mxu0 0.0
        %598 = vmatpush.msra.mxu0 0.0
        %599 = vmatpush.msra.mxu0 0.0
        %600 = vmatpush.msra.mxu0 %v582
        %601 = vmatpush.msra.mxu0 %v581
        %602 = vmatpush.msra.mxu0 %v580
        %603 = vmatpush.msra.mxu0 %v579
        %604 = vmatmul.f32.gmra.mxu0 %v586
        %v605 = vpop.f32.mrf.mxu0
        %v606 = vadd.f32 %v583, %v605
        %607 = vdwg.mxu0
        %608 = vst [vmem:[%s216] sm:$0x1] %v606
        %s609 = sand.u32 %s137, 1
        %s610 = scalar_lea.sflag [#allocation3], %s609
        %s611 = sand.u32 %s137, 1
        %s612 = scalar_lea.vmem [#allocation2], %s611
        // Predicated region
        $region41: #{model_forward.1} parent=39 // pred_check
          %p613 = pneg %p147
        $region42: #{model_forward.1} parent=39 // pred_check_branch
          %615 = sbr.rel (%p613) target = $region44
        $region43: #{model_forward.1} parent=39 // pred_region
          %617 = vsyncadd %s610, 0
          %s618 = scalar_lea.hbm %s5, %s19
          %s620 = sshll.u32 %s612, 4
          %s621 = int_to_ptr.vmem [resolvable:$true] %s620
          %s622 = sshll.u32 %s618, 4
          %s623 = int_to_ptr.hbm [resolvable:$true] %s622
          %625 = dma.vmem_to_hbm [thread:$0]  %s621, 16, %s623, %s610
        $region44: #{model_forward.1} parent=39 // pred_fallthru
          _
      $region40: #{model_forward.1} parent=5 // pred_fallthru
        _
      %p626 = scmp.le.s32.totalorder 2, %s14
      // Predicated region
      $region45: #{model_forward.1} parent=5 // pred_check
        %p627 = pneg %p626
      $region46: #{model_forward.1} parent=5 // pred_check_branch
        %629 = sbr.rel (%p627) target = $region48
      $region47: #{model_forward.1} parent=5 // pred_region
        %s630 = ssub.s32 %s14, 2
        // Predicated region
        $region49: #{model_forward.1} parent=47 // pred_check
          %p631 = pneg %p153
        $region50: #{model_forward.1} parent=47 // pred_check_branch
          %633 = sbr.rel (%p631) target = $region52
        $region51: #{model_forward.1} parent=47 // pred_region
          %s634 = sand.u32 %s138, 1
          %s635 = scalar_lea.sflag [#allocation3], %s634
          %s636 = sand.u32 %s138, 1
          %s637 = scalar_lea.vmem [#allocation2], %s636
          %639 = dma.done %s635, 16
        $region52: #{model_forward.1} parent=47 // pred_fallthru
          _
      $region48: #{model_forward.1} parent=5 // pred_fallthru
        _
    $region6: #{model_forward.1} parent=1 // loop_footer
      %s18 = sadd.s32 1, %s14
    $region7: #{model_forward.1} parent=1 // loop_footer_branch
      %13 = sbr.rel target = $region3
    $region8: #{model_forward.1} parent=1 // loop_exit
      _
    %640 = vsyncpa [#allocation3], 1
    %s641 = scalar_lea.sflag [#allocation3], 1
    %642 = vsyncpa %s641, 1

</llo_original>
